<compile_context>
chip_gen: v7x
topology: tpu7x:2x2x1
jax: 0.10.0
libtpu: 0.0.40
codegen_flags: <defaults>
</compile_context>

<pallas_src>
import functools

import jax
import jax.numpy as jnp
import numpy as np
from jax.experimental import pallas as pl
from jax.experimental.pallas import tpu as pltpu

SUB = 256  # cumsum sub-chunk width inside kernel 2 (triangular matmul size)


def _round_up(v, m):
    return ((v + m - 1) // m) * m


# --------------------------------------------------------------------------
# Kernel 1: softmax over classes + per-class negated Lovász errors (f32) and
# foreground indicator (int8).  Block layout: (C, T) -> classes on sublanes,
# pixels lane-dense.
# --------------------------------------------------------------------------
def _errors_kernel(logit_ref, target_ref, nerr_ref, fg_ref, *, hw, ignore, block_n):
    i = pl.program_id(1)

    x = logit_ref[...].astype(jnp.float32)           # (C, T)
    t = target_ref[...]                              # (1, T) int32

    # softmax over the class (sublane) axis
    m = jnp.max(x, axis=0, keepdims=True)            # (1, T)
    e = jnp.exp(x - m)                                # (C, T)
    prob = e / jnp.sum(e, axis=0, keepdims=True)      # (C, T)

    cls = jax.lax.broadcasted_iota(jnp.int32, x.shape, 0)                 # (C, T)
    pix = jax.lax.broadcasted_iota(jnp.int32, x.shape, 1) + i * block_n   # (C, T)
    tfull = t + jnp.zeros_like(cls)                                       # (C, T)

    # valid = real pixel (not ragged-tail padding) and not the ignore label
    valid = jnp.logical_and(pix < hw, tfull != ignore)                    # (C, T)

    is_fg = jnp.logical_and(valid, cls == tfull)                          # (C, T) bool
    fg_f = is_fg.astype(jnp.float32)

    # negated error: invalid pixels -> 0 (sorts to the zero-error tail)
    nerr = jnp.where(valid, -jnp.abs(fg_f - prob), 0.0)

    nerr_ref[...] = nerr.astype(jnp.float32)
    fg_ref[...] = is_fg.astype(jnp.int8)


# --------------------------------------------------------------------------
# Kernel 2: Lovász-Jaccard gradient + per-class dot product over the sorted
# (negated) errors.  grid = (class_blocks [parallel], pixel_tiles [arbitrary]).
# The per-class running foreground cumsum is carried in VMEM scratch and the
# (CBLK, 1) output block stays resident as the accumulator.  The within-tile
# inclusive cumsum is done in unrolled SUB-wide chunks via a bf16 triangular
# MXU matmul (exact: 0/1 inputs, f32 accumulation).
# --------------------------------------------------------------------------
def _lovasz_dot_kernel(gts_ref, nerr_ref, fg_ref, out_ref, cumfg_ref, tri_ref, *,
                       block_n, n_sub):
    i = pl.program_id(1)

    @pl.when(i == 0)
    def _():
        out_ref[...] = jnp.zeros_like(out_ref)
        cumfg_ref[...] = jnp.zeros_like(cumfg_ref)
        r = jax.lax.broadcasted_iota(jnp.int32, (SUB, SUB), 0)
        c = jax.lax.broadcasted_iota(jnp.int32, (SUB, SUB), 1)
        tri_ref[...] = (r <= c).astype(tri_ref.dtype)       # tri[k, j] = (k <= j)

    gts = gts_ref[...]                                       # (CBLK, 1) f32
    tri = tri_ref[...]                                       # (SUB, SUB) bf16

    run = cumfg_ref[...]                                     # carried fg cumsum
    acc = jnp.zeros_like(run)
    base = i * block_n

    for s in range(n_sub):                                   # static, fully unrolled
        off = s * SUB
        fg_f = fg_ref[:, off:off + SUB].astype(jnp.float32)  # (CBLK, SUB) in {0,1}
        nerr_c = nerr_ref[:, off:off + SUB]                  # (CBLK, SUB) = -err

        # inclusive cumsum within the chunk + carry from all previous pixels
        cum = run + jnp.dot(fg_f.astype(jnp.bfloat16), tri,
                            preferred_element_type=jnp.float32)

        lane = jax.lax.broadcasted_iota(jnp.int32, cum.shape, 1)
        pos = (lane + (base + off) + 1).astype(jnp.float32)   # 1-based global pos

        cum_x = cum - fg_f                                    # exclusive cumsum
        jac = 1.0 - (gts - cum) / (gts + pos - cum)
        den_p = jnp.where(pos <= 1.0, 1.0, gts + (pos - 1.0) - cum_x)
        jac_p = jnp.where(pos <= 1.0, 0.0, 1.0 - (gts - cum_x) / den_p)

        # err = -nerr, so fold the sign into the accumulation
        acc = acc - jnp.sum(nerr_c * (jac - jac_p), axis=1, keepdims=True)
        run = run + jnp.sum(fg_f, axis=1, keepdims=True)

    out_ref[...] += acc
    cumfg_ref[...] = run


# --------------------------------------------------------------------------
# Wrapper
# --------------------------------------------------------------------------
def _lovasz_flat(logits, targets, only_present, ignore, block_pix):
    B, C, H, W = map(int, logits.shape)
    HW = H * W

    # kernel-1 lane tile: big (default 8192), VMEM-aware cap (v7x: 64 MiB phys).
    block_pix = max(256, (int(block_pix) // 256) * 256)
    per_pix = 2 * (9 * C + 8)                     # double-buffered in+out bytes/pixel
    t_cap = max(256, ((36 * (1 << 20)) // per_pix) // 256 * 256)
    T = min(block_pix, t_cap, _round_up(HW, 256))
    n_tiles = pl.cdiv(HW, T)
    Npad = B * n_tiles * T

    x = logits.reshape(B, C, HW)                   # free reshape, native NCHW
    t = targets.reshape(B, 1, HW).astype(jnp.int32)

    nerr, fg = pl.pallas_call(
        functools.partial(_errors_kernel, hw=HW, ignore=int(ignore), block_n=T),
        out_shape=(jax.ShapeDtypeStruct((C, Npad), jnp.float32),
                   jax.ShapeDtypeStruct((C, Npad), jnp.int8)),
        grid_spec=pltpu.PrefetchScalarGridSpec(
            num_scalar_prefetch=0,
            grid=(B, n_tiles),
            in_specs=[
                pl.BlockSpec((None, C, T), lambda b, i: (b, 0, i)),
                pl.BlockSpec((None, 1, T), lambda b, i: (b, 0, i)),
            ],
            out_specs=[
                pl.BlockSpec((C, T), lambda b, i: (0, b * n_tiles + i)),
                pl.BlockSpec((C, T), lambda b, i: (0, b * n_tiles + i)),
            ],
        ),
        compiler_params=pltpu.CompilerParams(
            dimension_semantics=("parallel", "parallel"),
            vmem_limit_bytes=48 * 1024 * 1024),
    )(x, t)

    # per-class total foreground count (order-invariant; cheap int8 read)
    gts = jnp.sum(fg, axis=1, keepdims=True, dtype=jnp.float32)        # (C, 1)

    # TODO(synk): per-class descending sort has no Pallas TPU equivalent; done
    # with an unstable XLA variadic sort (nerr = -err, so ascending == desc).
    nerr_sorted, fg_sorted = jax.lax.sort((nerr, fg), dimension=1,
                                          num_keys=1, is_stable=False)

    # kernel-2 pixel tile: largest multiple of SUB that divides Npad, <= 2048.
    T2 = max(d for d in range(SUB, 2048 + 1, SUB) if Npad % d == 0)
    n2 = Npad // T2
    n_sub = T2 // SUB

    # class-parallel split (feeds both v7x TensorCores); harmless on v5e/v6e.
    cblk = C // 2 if (C % 16 == 0) else C
    n_cblk = C // cblk

    per_class = pl.pallas_call(
        functools.partial(_lovasz_dot_kernel, block_n=T2, n_sub=n_sub),
        out_shape=jax.ShapeDtypeStruct((C, 1), jnp.float32),
        grid_spec=pltpu.PrefetchScalarGridSpec(
            num_scalar_prefetch=0,
            grid=(n_cblk, n2),
            in_specs=[
                pl.BlockSpec((cblk, 1), lambda c, i: (c, 0)),      # gts
                pl.BlockSpec((cblk, T2), lambda c, i: (c, i)),     # -err sorted
                pl.BlockSpec((cblk, T2), lambda c, i: (c, i)),     # fg sorted (i8)
            ],
            out_specs=pl.BlockSpec((cblk, 1), lambda c, i: (c, 0)),
            scratch_shapes=[pltpu.VMEM((cblk, 1), jnp.float32),
                            pltpu.VMEM((SUB, SUB), jnp.bfloat16)],
        ),
        compiler_params=pltpu.CompilerParams(
            dimension_semantics=("parallel", "arbitrary"),
            vmem_limit_bytes=48 * 1024 * 1024),
    )(gts, nerr_sorted, fg_sorted)

    per_class = per_class[:, 0]                                        # (C,)
    if only_present:
        present = (gts[:, 0] > 0).astype(jnp.float32)
        return jnp.sum(per_class * present) / jnp.maximum(jnp.sum(present), 1.0)
    return jnp.mean(per_class)


def lovasz_loss(inputs, targets, only_present=False, per_image=False,
                ignore=255, index=None, block_pix=8192):
    """inputs: (B, C, H, W) logits; targets: (B, h, w) int class labels."""
    if index is not None:
        inputs = inputs[index]
    B, C, H, W = map(int, inputs.shape)
    th, tw = int(targets.shape[1]), int(targets.shape[2])
    if (H, W) != (th, tw):
        # TODO(synk): bilinear upsample has no clean Pallas equivalent; uses
        # jax.image.resize (align_corners semantics may differ from F.upsample).
        inputs = jax.image.resize(inputs, (B, C, th, tw), method="bilinear")
    if per_image:
        per = [_lovasz_flat(inputs[b:b + 1], targets[b:b + 1],
                            only_present, ignore, block_pix) for b in range(B)]
        return jnp.mean(jnp.stack(per))
    return _lovasz_flat(inputs, targets, only_present, ignore, block_pix)


class LovaszLoss:
    def __init__(self, only_present=False, per_image=False, ignore=255):
        self.only_present = only_present
        self.per_image = per_image
        self.ignore = ignore

    def __call__(self, inputs, targets, index=None):
        return lovasz_loss(inputs, targets, only_present=self.only_present,
                           per_image=self.per_image, ignore=self.ignore,
                           index=index)


# --------------------------------------------------------------------------
# Pure numpy reference (mirrors the PyTorch Lovász-Softmax code path).
# --------------------------------------------------------------------------
def _reference_lovasz(logits, targets, only_present=False, ignore=255):
    logits = np.asarray(logits, np.float64)
    targets = np.asarray(targets)
    B, C, H, W = logits.shape
    x = np.transpose(logits, (0, 2, 3, 1)).reshape(-1, C)
    x = x - x.max(axis=1, keepdims=True)
    p = np.exp(x)
    p /= p.sum(axis=1, keepdims=True)
    labels = targets.reshape(-1)
    keep = labels != ignore
    p = p[keep]
    labels = labels[keep]
    losses = []
    for c in range(C):
        fg = (labels == c).astype(np.float64)
        if only_present and fg.sum() == 0:
            continue
        errors = np.abs(fg - p[:, c])
        order = np.argsort(-errors, kind="stable")
        e_s = errors[order]
        fg_s = fg[order]
        gts = fg_s.sum()
        inter = gts - np.cumsum(fg_s)
        union = gts + np.cumsum(1.0 - fg_s)
        jac = 1.0 - inter / union
        grad = jac.copy()
        if len(jac) > 1:
            grad[1:] = jac[1:] - jac[:-1]
        losses.append(float((e_s * grad).sum()))
    return float(np.mean(losses)) if losses else 0.0


if __name__ == "__main__":
    key = jax.random.PRNGKey(0)
    k1, k2, k3 = jax.random.split(key, 3)

    B, C, H, W = 2, 4, 16, 16
    logits = jax.random.normal(k1, (B, C, H, W), dtype=jnp.float32)
    targets = jax.random.randint(k2, (B, H, W), 0, C, dtype=jnp.int32)
    # sprinkle some ignore (=255) pixels to exercise the ignore path
    targets = jnp.where(jax.random.uniform(k3, (B, H, W)) < 0.1, 255, targets)

    module = LovaszLoss(only_present=False, per_image=False, ignore=255)
    loss = jax.block_until_ready(jax.jit(module.__call__)(logits, targets))

    ref = _reference_lovasz(np.asarray(logits), np.asarray(targets),
                            only_present=False, ignore=255)
    assert np.isfinite(float(loss)), float(loss)
    assert abs(float(loss) - ref) <= 1e-3 * max(1.0, abs(ref)), (float(loss), ref)
    print("KERNEL_OK")
</pallas_src>

<mosaic_0001>
module attributes {stable_mosaic.version = 11 : i64} {
  func.func @_errors_kernel(%arg0: i32, %arg1: i32, %arg2: memref<1x4x256xf32, #tpu.memory_space<vmem>>, %arg3: memref<1x1x256xi32, #tpu.memory_space<vmem>>, %arg4: memref<4x256xf32, #tpu.memory_space<vmem>>, %arg5: memref<4x256xi8, #tpu.memory_space<vmem>>) attributes {dimension_semantics = [#tpu.dimension_semantics<parallel>, #tpu.dimension_semantics<parallel>], iteration_bounds = array<i64: 2, 1>, scalar_prefetch = 0 : i64, scratch_operands = 0 : i64, tpu.core_type = #tpu.core_type<tc>, window_params = [{transform_indices = @transform_0, window_bounds = array<i64: 1, 4, 256>}, {transform_indices = @transform_1, window_bounds = array<i64: 1, 1, 256>}, {transform_indices = @transform_2, window_bounds = array<i64: 4, 256>}, {transform_indices = @transform_3, window_bounds = array<i64: 4, 256>}]} {
    %c0 = arith.constant 0 : index
    %c0_0 = arith.constant 0 : index
    %c0_1 = arith.constant 0 : index
    %0 = vector.load %arg2[%c0, %c0_0, %c0_1] : memref<1x4x256xf32, #tpu.memory_space<vmem>>, vector<1x4x256xf32>
    %1 = vector.shape_cast %0 : vector<1x4x256xf32> to vector<4x256xf32>
    %c0_2 = arith.constant 0 : index
    %c0_3 = arith.constant 0 : index
    %c0_4 = arith.constant 0 : index
    %2 = vector.load %arg3[%c0_2, %c0_3, %c0_4] : memref<1x1x256xi32, #tpu.memory_space<vmem>>, vector<1x1x256xi32>
    %3 = vector.shape_cast %2 : vector<1x1x256xi32> to vector<1x256xi32>
    %cst = arith.constant dense<0xFF800000> : vector<256xf32>
    %4 = vector.multi_reduction <maximumf>, %1, %cst [0] : vector<4x256xf32> to vector<256xf32>
    %5 = vector.shape_cast %4 : vector<256xf32> to vector<1x256xf32>
    %6 = vector.broadcast %5 : vector<1x256xf32> to vector<4x256xf32>
    %7 = arith.subf %1, %6 : vector<4x256xf32>
    %8 = math.exp %7 : vector<4x256xf32>
    %cst_5 = arith.constant dense<0.000000e+00> : vector<256xf32>
    %9 = vector.multi_reduction <add>, %8, %cst_5 [0] : vector<4x256xf32> to vector<256xf32>
    %10 = vector.shape_cast %9 : vector<256xf32> to vector<1x256xf32>
    %11 = vector.broadcast %10 : vector<1x256xf32> to vector<4x256xf32>
    %12 = arith.divf %8, %11 : vector<4x256xf32>
    %13 = tpu.iota {dimensions = array<i32: 0>} : vector<4x256xi32>
    %14 = tpu.iota {dimensions = array<i32: 1>} : vector<4x256xi32>
    %c256_i32 = arith.constant 256 : i32
    %15 = arith.muli %arg1, %c256_i32 : i32
    %16 = vector.broadcast %15 : i32 to vector<4x256xi32>
    %17 = arith.addi %14, %16 : vector<4x256xi32>
    %c0_i32 = arith.constant 0 : i32
    %18 = vector.broadcast %c0_i32 : i32 to vector<4x256xi32>
    %19 = vector.broadcast %3 : vector<1x256xi32> to vector<4x256xi32>
    %20 = arith.addi %19, %18 : vector<4x256xi32>
    %c256_i32_6 = arith.constant 256 : i32
    %21 = vector.broadcast %c256_i32_6 : i32 to vector<4x256xi32>
    %22 = arith.cmpi slt, %17, %21 : vector<4x256xi32>
    %c255_i32 = arith.constant 255 : i32
    %23 = vector.broadcast %c255_i32 : i32 to vector<4x256xi32>
    %24 = arith.cmpi ne, %20, %23 : vector<4x256xi32>
    %25 = arith.andi %22, %24 : vector<4x256xi1>
    %26 = arith.cmpi eq, %13, %20 : vector<4x256xi32>
    %27 = arith.andi %25, %26 : vector<4x256xi1>
    %28 = arith.extui %27 : vector<4x256xi1> to vector<4x256xi32>
    %29 = arith.sitofp %28 : vector<4x256xi32> to vector<4x256xf32>
    %30 = arith.subf %29, %12 : vector<4x256xf32>
    %31 = math.absf %30 : vector<4x256xf32>
    %cst_7 = arith.constant 0.000000e+00 : f32
    %32 = vector.broadcast %cst_7 : f32 to vector<4x256xf32>
    %33 = arith.subf %32, %31 : vector<4x256xf32>
    %cst_8 = arith.constant 0.000000e+00 : f32
    %34 = vector.broadcast %cst_8 : f32 to vector<4x256xf32>
    %35 = arith.select %25, %33, %34 : vector<4x256xi1>, vector<4x256xf32>
    %c0_9 = arith.constant 0 : index
    %c0_10 = arith.constant 0 : index
    %36 = vector.load %arg4[%c0_9, %c0_10] : memref<4x256xf32, #tpu.memory_space<vmem>>, vector<4x256xf32>
    tpu.vector_store %arg4[%c0_9, %c0_10], %35 {strides = array<i32>} : memref<4x256xf32, #tpu.memory_space<vmem>>, vector<4x256xf32>,
    %37 = arith.extui %27 : vector<4x256xi1> to vector<4x256xi8>
    %c0_11 = arith.constant 0 : index
    %c0_12 = arith.constant 0 : index
    %38 = vector.load %arg5[%c0_11, %c0_12] : memref<4x256xi8, #tpu.memory_space<vmem>>, vector<4x256xi8>
    tpu.vector_store %arg5[%c0_11, %c0_12], %37 {strides = array<i32>} : memref<4x256xi8, #tpu.memory_space<vmem>>, vector<4x256xi8>,
    return
  }
  func.func @transform_0(%arg0: i32, %arg1: i32) -> (i32, i32, i32) {
    %c0_i32 = arith.constant 0 : i32
    %c0_i32_0 = arith.constant 0 : i32
    return %arg0, %c0_i32, %arg1 : i32, i32, i32
  }
  func.func @transform_1(%arg0: i32, %arg1: i32) -> (i32, i32, i32) {
    %c0_i32 = arith.constant 0 : i32
    %c0_i32_0 = arith.constant 0 : i32
    return %arg0, %c0_i32, %arg1 : i32, i32, i32
  }
  func.func @transform_2(%arg0: i32, %arg1: i32) -> (i32, i32) {
    %c1_i32 = arith.constant 1 : i32
    %0 = arith.muli %arg0, %c1_i32 : i32
    %1 = arith.addi %0, %arg1 : i32
    %c0_i32 = arith.constant 0 : i32
    %c0_i32_0 = arith.constant 0 : i32
    return %c0_i32, %1 : i32, i32
  }
  func.func @transform_3(%arg0: i32, %arg1: i32) -> (i32, i32) {
    %c1_i32 = arith.constant 1 : i32
    %0 = arith.muli %arg0, %c1_i32 : i32
    %1 = arith.addi %0, %arg1 : i32
    %c0_i32 = arith.constant 0 : i32
    %c0_i32_0 = arith.constant 0 : i32
    return %c0_i32, %1 : i32, i32
  }
}

module attributes {stable_mosaic.version = 11 : i64} {
  func.func @_lovasz_dot_kernel(%arg0: i32, %arg1: i32, %arg2: memref<4x1xf32, #tpu.memory_space<vmem>>, %arg3: memref<4x512xf32, #tpu.memory_space<vmem>>, %arg4: memref<4x512xi8, #tpu.memory_space<vmem>>, %arg5: memref<4x1xf32, #tpu.memory_space<vmem>>, %arg6: memref<4x1xf32, #tpu.memory_space<vmem>>, %arg7: memref<256x256xbf16, #tpu.memory_space<vmem>>) attributes {dimension_semantics = [#tpu.dimension_semantics<parallel>, #tpu.dimension_semantics<arbitrary>], iteration_bounds = array<i64: 1, 1>, scalar_prefetch = 0 : i64, scratch_operands = 2 : i64, tpu.core_type = #tpu.core_type<tc>, window_params = [{transform_indices = @transform_0, window_bounds = array<i64: 4, 1>}, {transform_indices = @transform_1, window_bounds = array<i64: 4, 512>}, {transform_indices = @transform_2, window_bounds = array<i64: 4, 512>}, {transform_indices = @transform_3, window_bounds = array<i64: 4, 1>}]} {
    %c0_i32 = arith.constant 0 : i32
    %0 = arith.cmpi eq, %arg1, %c0_i32 : i32
    %1 = arith.extui %0 : i1 to i32
    %c0_i32_0 = arith.constant 0 : i32
    %2 = arith.cmpi ne, %1, %c0_i32_0 : i32
    scf.if %2 {
      %cst_41 = arith.constant 0.000000e+00 : f32
      %110 = vector.broadcast %cst_41 : f32 to vector<4x1xf32>
      %c0_42 = arith.constant 0 : index
      %c0_43 = arith.constant 0 : index
      %111 = vector.load %arg5[%c0_42, %c0_43] : memref<4x1xf32, #tpu.memory_space<vmem>>, vector<4x1xf32>
      tpu.vector_store %arg5[%c0_42, %c0_43], %110 {strides = array<i32>} : memref<4x1xf32, #tpu.memory_space<vmem>>, vector<4x1xf32>,
      %cst_44 = arith.constant 0.000000e+00 : f32
      %112 = vector.broadcast %cst_44 : f32 to vector<4x1xf32>
      %c0_45 = arith.constant 0 : index
      %c0_46 = arith.constant 0 : index
      %113 = vector.load %arg6[%c0_45, %c0_46] : memref<4x1xf32, #tpu.memory_space<vmem>>, vector<4x1xf32>
      tpu.vector_store %arg6[%c0_45, %c0_46], %112 {strides = array<i32>} : memref<4x1xf32, #tpu.memory_space<vmem>>, vector<4x1xf32>,
      %114 = tpu.iota {dimensions = array<i32: 0>} : vector<256x256xi32>
      %115 = tpu.iota {dimensions = array<i32: 1>} : vector<256x256xi32>
      %116 = arith.cmpi sle, %114, %115 : vector<256x256xi32>
      %117 = arith.extui %116 : vector<256x256xi1> to vector<256x256xi32>
      %118 = arith.sitofp %117 : vector<256x256xi32> to vector<256x256xf32>
      %119 = arith.truncf %118 : vector<256x256xf32> to vector<256x256xbf16>
      %c0_47 = arith.constant 0 : index
      %c0_48 = arith.constant 0 : index
      %120 = vector.load %arg7[%c0_47, %c0_48] : memref<256x256xbf16, #tpu.memory_space<vmem>>, vector<256x256xbf16>
      tpu.vector_store %arg7[%c0_47, %c0_48], %119 {strides = array<i32>} : memref<256x256xbf16, #tpu.memory_space<vmem>>, vector<256x256xbf16>,
    } else {
    }
    %c0 = arith.constant 0 : index
    %c0_1 = arith.constant 0 : index
    %3 = vector.load %arg2[%c0, %c0_1] : memref<4x1xf32, #tpu.memory_space<vmem>>, vector<4x1xf32>
    %c0_2 = arith.constant 0 : index
    %c0_3 = arith.constant 0 : index
    %4 = vector.load %arg7[%c0_2, %c0_3] : memref<256x256xbf16, #tpu.memory_space<vmem>>, vector<256x256xbf16>
    %c0_4 = arith.constant 0 : index
    %c0_5 = arith.constant 0 : index
    %5 = vector.load %arg6[%c0_4, %c0_5] : memref<4x1xf32, #tpu.memory_space<vmem>>, vector<4x1xf32>
    %cst = arith.constant 0.000000e+00 : f32
    %6 = vector.broadcast %cst : f32 to vector<4x1xf32>
    %c512_i32 = arith.constant 512 : i32
    %7 = arith.muli %arg1, %c512_i32 : i32
    %c0_6 = arith.constant 0 : index
    %c0_7 = arith.constant 0 : index
    %8 = vector.load %arg4[%c0_6, %c0_7] : memref<4x512xi8, #tpu.memory_space<vmem>>, vector<4x256xi8>
    %9 = arith.sitofp %8 : vector<4x256xi8> to vector<4x256xf32>
    %c0_8 = arith.constant 0 : index
    %c0_9 = arith.constant 0 : index
    %10 = vector.load %arg3[%c0_8, %c0_9] : memref<4x512xf32, #tpu.memory_space<vmem>>, vector<4x256xf32>
    %11 = arith.truncf %9 : vector<4x256xf32> to vector<4x256xbf16>
    %cst_10 = arith.constant dense<0.000000e+00> : vector<4x256xf32>
    %12 = tpu.matmul %11, %4, %cst_10 {dimension_numbers = #tpu.dot_dimension_numbers<[1], [0], [0], [1], [0, 0, 1, 1], [], []>} : vector<4x256xbf16>, vector<256x256xbf16>, vector<4x256xf32> -> vector<4x256xf32>
    %13 = vector.broadcast %5 : vector<4x1xf32> to vector<4x256xf32>
    %14 = arith.addf %13, %12 : vector<4x256xf32>
    %15 = tpu.iota {dimensions = array<i32: 1>} : vector<4x256xi32>
    %c0_i32_11 = arith.constant 0 : i32
    %16 = arith.addi %7, %c0_i32_11 : i32
    %17 = vector.broadcast %16 : i32 to vector<4x256xi32>
    %18 = arith.addi %15, %17 : vector<4x256xi32>
    %c1_i32 = arith.constant 1 : i32
    %19 = vector.broadcast %c1_i32 : i32 to vector<4x256xi32>
    %20 = arith.addi %18, %19 : vector<4x256xi32>
    %21 = arith.sitofp %20 : vector<4x256xi32> to vector<4x256xf32>
    %22 = arith.subf %14, %9 : vector<4x256xf32>
    %23 = vector.broadcast %3 : vector<4x1xf32> to vector<4x256xf32>
    %24 = arith.subf %23, %14 : vector<4x256xf32>
    %25 = vector.broadcast %3 : vector<4x1xf32> to vector<4x256xf32>
    %26 = arith.addf %25, %21 : vector<4x256xf32>
    %27 = arith.subf %26, %14 : vector<4x256xf32>
    %28 = arith.divf %24, %27 : vector<4x256xf32>
    %cst_12 = arith.constant 1.000000e+00 : f32
    %29 = vector.broadcast %cst_12 : f32 to vector<4x256xf32>
    %30 = arith.subf %29, %28 : vector<4x256xf32>
    %cst_13 = arith.constant 1.000000e+00 : f32
    %31 = vector.broadcast %cst_13 : f32 to vector<4x256xf32>
    %32 = arith.cmpf ole, %21, %31 : vector<4x256xf32>
    %cst_14 = arith.constant 1.000000e+00 : f32
    %33 = vector.broadcast %cst_14 : f32 to vector<4x256xf32>
    %34 = arith.subf %21, %33 : vector<4x256xf32>
    %35 = vector.broadcast %3 : vector<4x1xf32> to vector<4x256xf32>
    %36 = arith.addf %35, %34 : vector<4x256xf32>
    %37 = arith.subf %36, %22 : vector<4x256xf32>
    %cst_15 = arith.constant 1.000000e+00 : f32
    %38 = vector.broadcast %cst_15 : f32 to vector<4x256xf32>
    %39 = arith.select %32, %38, %37 : vector<4x256xi1>, vector<4x256xf32>
    %cst_16 = arith.constant 1.000000e+00 : f32
    %40 = vector.broadcast %cst_16 : f32 to vector<4x256xf32>
    %41 = arith.cmpf ole, %21, %40 : vector<4x256xf32>
    %42 = vector.broadcast %3 : vector<4x1xf32> to vector<4x256xf32>
    %43 = arith.subf %42, %22 : vector<4x256xf32>
    %44 = arith.divf %43, %39 : vector<4x256xf32>
    %cst_17 = arith.constant 1.000000e+00 : f32
    %45 = vector.broadcast %cst_17 : f32 to vector<4x256xf32>
    %46 = arith.subf %45, %44 : vector<4x256xf32>
    %cst_18 = arith.constant 0.000000e+00 : f32
    %47 = vector.broadcast %cst_18 : f32 to vector<4x256xf32>
    %48 = arith.select %41, %47, %46 : vector<4x256xi1>, vector<4x256xf32>
    %49 = arith.subf %30, %48 : vector<4x256xf32>
    %50 = arith.mulf %10, %49 : vector<4x256xf32>
    %cst_19 = arith.constant dense<0.000000e+00> : vector<4xf32>
    %51 = vector.multi_reduction <add>, %50, %cst_19 [1] : vector<4x256xf32> to vector<4xf32>
    %52 = vector.shape_cast %51 : vector<4xf32> to vector<4x1xf32>
    %53 = arith.subf %6, %52 : vector<4x1xf32>
    %cst_20 = arith.constant dense<0.000000e+00> : vector<4xf32>
    %54 = vector.multi_reduction <add>, %9, %cst_20 [1] : vector<4x256xf32> to vector<4xf32>
    %55 = vector.shape_cast %54 : vector<4xf32> to vector<4x1xf32>
    %56 = arith.addf %5, %55 : vector<4x1xf32>
    %c0_21 = arith.constant 0 : index
    %c256 = arith.constant 256 : index
    %57 = vector.load %arg4[%c0_21, %c256] : memref<4x512xi8, #tpu.memory_space<vmem>>, vector<4x256xi8>
    %58 = arith.sitofp %57 : vector<4x256xi8> to vector<4x256xf32>
    %c0_22 = arith.constant 0 : index
    %c256_23 = arith.constant 256 : index
    %59 = vector.load %arg3[%c0_22, %c256_23] : memref<4x512xf32, #tpu.memory_space<vmem>>, vector<4x256xf32>
    %60 = arith.truncf %58 : vector<4x256xf32> to vector<4x256xbf16>
    %cst_24 = arith.constant dense<0.000000e+00> : vector<4x256xf32>
    %61 = tpu.matmul %60, %4, %cst_24 {dimension_numbers = #tpu.dot_dimension_numbers<[1], [0], [0], [1], [0, 0, 1, 1], [], []>} : vector<4x256xbf16>, vector<256x256xbf16>, vector<4x256xf32> -> vector<4x256xf32>
    %62 = vector.broadcast %56 : vector<4x1xf32> to vector<4x256xf32>
    %63 = arith.addf %62, %61 : vector<4x256xf32>
    %64 = tpu.iota {dimensions = array<i32: 1>} : vector<4x256xi32>
    %c256_i32 = arith.constant 256 : i32
    %65 = arith.addi %7, %c256_i32 : i32
    %66 = vector.broadcast %65 : i32 to vector<4x256xi32>
    %67 = arith.addi %64, %66 : vector<4x256xi32>
    %c1_i32_25 = arith.constant 1 : i32
    %68 = vector.broadcast %c1_i32_25 : i32 to vector<4x256xi32>
    %69 = arith.addi %67, %68 : vector<4x256xi32>
    %70 = arith.sitofp %69 : vector<4x256xi32> to vector<4x256xf32>
    %71 = arith.subf %63, %58 : vector<4x256xf32>
    %72 = vector.broadcast %3 : vector<4x1xf32> to vector<4x256xf32>
    %73 = arith.subf %72, %63 : vector<4x256xf32>
    %74 = vector.broadcast %3 : vector<4x1xf32> to vector<4x256xf32>
    %75 = arith.addf %74, %70 : vector<4x256xf32>
    %76 = arith.subf %75, %63 : vector<4x256xf32>
    %77 = arith.divf %73, %76 : vector<4x256xf32>
    %cst_26 = arith.constant 1.000000e+00 : f32
    %78 = vector.broadcast %cst_26 : f32 to vector<4x256xf32>
    %79 = arith.subf %78, %77 : vector<4x256xf32>
    %cst_27 = arith.constant 1.000000e+00 : f32
    %80 = vector.broadcast %cst_27 : f32 to vector<4x256xf32>
    %81 = arith.cmpf ole, %70, %80 : vector<4x256xf32>
    %cst_28 = arith.constant 1.000000e+00 : f32
    %82 = vector.broadcast %cst_28 : f32 to vector<4x256xf32>
    %83 = arith.subf %70, %82 : vector<4x256xf32>
    %84 = vector.broadcast %3 : vector<4x1xf32> to vector<4x256xf32>
    %85 = arith.addf %84, %83 : vector<4x256xf32>
    %86 = arith.subf %85, %71 : vector<4x256xf32>
    %cst_29 = arith.constant 1.000000e+00 : f32
    %87 = vector.broadcast %cst_29 : f32 to vector<4x256xf32>
    %88 = arith.select %81, %87, %86 : vector<4x256xi1>, vector<4x256xf32>
    %cst_30 = arith.constant 1.000000e+00 : f32
    %89 = vector.broadcast %cst_30 : f32 to vector<4x256xf32>
    %90 = arith.cmpf ole, %70, %89 : vector<4x256xf32>
    %91 = vector.broadcast %3 : vector<4x1xf32> to vector<4x256xf32>
    %92 = arith.subf %91, %71 : vector<4x256xf32>
    %93 = arith.divf %92, %88 : vector<4x256xf32>
    %cst_31 = arith.constant 1.000000e+00 : f32
    %94 = vector.broadcast %cst_31 : f32 to vector<4x256xf32>
    %95 = arith.subf %94, %93 : vector<4x256xf32>
    %cst_32 = arith.constant 0.000000e+00 : f32
    %96 = vector.broadcast %cst_32 : f32 to vector<4x256xf32>
    %97 = arith.select %90, %96, %95 : vector<4x256xi1>, vector<4x256xf32>
    %98 = arith.subf %79, %97 : vector<4x256xf32>
    %99 = arith.mulf %59, %98 : vector<4x256xf32>
    %cst_33 = arith.constant dense<0.000000e+00> : vector<4xf32>
    %100 = vector.multi_reduction <add>, %99, %cst_33 [1] : vector<4x256xf32> to vector<4xf32>
    %101 = vector.shape_cast %100 : vector<4xf32> to vector<4x1xf32>
    %102 = arith.subf %53, %101 : vector<4x1xf32>
    %cst_34 = arith.constant dense<0.000000e+00> : vector<4xf32>
    %103 = vector.multi_reduction <add>, %58, %cst_34 [1] : vector<4x256xf32> to vector<4xf32>
    %104 = vector.shape_cast %103 : vector<4xf32> to vector<4x1xf32>
    %105 = arith.addf %56, %104 : vector<4x1xf32>
    %c0_35 = arith.constant 0 : index
    %c0_36 = arith.constant 0 : index
    %106 = vector.load %arg5[%c0_35, %c0_36] : memref<4x1xf32, #tpu.memory_space<vmem>>, vector<4x1xf32>
    %107 = arith.addf %106, %102 : vector<4x1xf32>
    %c0_37 = arith.constant 0 : index
    %c0_38 = arith.constant 0 : index
    %108 = vector.load %arg5[%c0_37, %c0_38] : memref<4x1xf32, #tpu.memory_space<vmem>>, vector<4x1xf32>
    tpu.vector_store %arg5[%c0_37, %c0_38], %107 {strides = array<i32>} : memref<4x1xf32, #tpu.memory_space<vmem>>, vector<4x1xf32>,
    %c0_39 = arith.constant 0 : index
    %c0_40 = arith.constant 0 : index
    %109 = vector.load %arg6[%c0_39, %c0_40] : memref<4x1xf32, #tpu.memory_space<vmem>>, vector<4x1xf32>
    tpu.vector_store %arg6[%c0_39, %c0_40], %105 {strides = array<i32>} : memref<4x1xf32, #tpu.memory_space<vmem>>, vector<4x1xf32>,
    return
  }
  func.func @transform_0(%arg0: i32, %arg1: i32) -> (i32, i32) {
    %c0_i32 = arith.constant 0 : i32
    %c0_i32_0 = arith.constant 0 : i32
    return %arg0, %c0_i32 : i32, i32
  }
  func.func @transform_1(%arg0: i32, %arg1: i32) -> (i32, i32) {
    %c0_i32 = arith.constant 0 : i32
    return %arg0, %arg1 : i32, i32
  }
  func.func @transform_2(%arg0: i32, %arg1: i32) -> (i32, i32) {
    %c0_i32 = arith.constant 0 : i32
    return %arg0, %arg1 : i32, i32
  }
  func.func @transform_3(%arg0: i32, %arg1: i32) -> (i32, i32) {
    %c0_i32 = arith.constant 0 : i32
    %c0_i32_0 = arith.constant 0 : i32
    return %arg0, %c0_i32 : i32, i32
  }
}

</mosaic_0001>

<llo_original>
// kernel: a_call__.2
$region0: #{a_call__.2}
  #allocation0 [shape = 'u32[]', space=smem, size = 0x4, offset = 0x4, fixed_abs, tag = 'smem constant byte address 0x4 - core index']
  #allocation1 [shape = 'u32[144,128]{1,0:T(1,128)}', space=vmem, size = 0x12000, scoped, tag = 'internal scratch']
  %s0 = inlined_call_operand.vmem [shape: f32[2,4,256], index: 0, kind: input, shape index: {}]
  %s1 = inlined_call_operand.vmem [shape: s32[2,1,256], index: 1, kind: input, shape index: {}]
  %s2 = inlined_call_operand.vmem [shape: f32[4,512], index: 2, kind: output, shape index: {0}]
  %s3 = inlined_call_operand.vmem [shape: s8[4,512], index: 3, kind: output, shape index: {1}]
  %4 = xla_tuple %s2, %s3
  %s5 = sld [smem:[#allocation0]]
  $region49: #{a_call__.2} parent=0
    _
  %s7 = ssub.s32 1, %s5
  %s8 = scalar_select 0, %s7, %s5
  loop: start=0, step=1, limit=4
  $region2: #{a_call__.2} parent=0 // loop_pre_header
    _
  $region3: #{a_call__.2} parent=0 // loop_header
    %s10 = sphi 0, %s14
    %p11 = scmp.ge.s32.totalorder %s10, 4
    %s17 = sphi 0, %s29
    %s18 = sphi 0, %s25
    %s19 = sphi 0, %s17
    %s20 = sphi 0, %s18
    %s21 = sphi 0, %s19
    %s22 = sphi 0, %s20
    %s34 = sphi 0, %s36
    %s37 = sphi 0, %s34
    %s38 = sphi 0, %s37
    %s54 = sphi 0, %s38
    %s62 = sphi 0, %s64
    %s65 = sphi 0, %s62
    %s66 = sphi 0, %s65
    %s82 = sphi 0, %s66
    %s90 = sphi 0, %s92
    %s93 = sphi 0, %s90
    %s94 = sphi 0, %s93
    %s110 = sphi 0, %s94
    %s118 = sphi 0, %s120
    %s121 = sphi 0, %s118
    %s122 = sphi 0, %s121
    %s138 = sphi 0, %s122
  $region4: #{a_call__.2} parent=0 // loop_header_branch
    %13 = sbr.rel (%p11) target = $region8
  $region5: #{a_call__.2} parent=0 // loop_body
    %s15 = ssub.s32 %s10, 1
    %s16 = ssub.s32 %s10, 2
    %s23 = sadd.s32 1, %s18
    %p24 = scmp.ge.s32.totalorder %s23, 1
    %s25 = scalar_select %p24, 0, %s23
    %s26 = sadd.s32 1, %s17
    %s27 = scalar_select %p24, %s26, %s17
    %p28 = scmp.ge.s32.totalorder %s27, 2
    %s29 = scalar_select %p28, 0, %s27
    %s30 = ssub.s32 %s17, %s29
    %s31 = ssub.s32 %s18, %s25
    %s32 = sor.u32 %s30, %s31
    %p33 = scmp.eq.s32.totalorder %s32, 0
    %s35 = sadd.s32 %s34, 1
    %s36 = scalar_select %p33, %s34, %s35
    %p39 = pneg %p33
    %p40 = scmp.eq.s32.totalorder %s10, 1
    %p41 = por %p39, %p40
    %p42 = scmp.ne.s32.totalorder %s34, %s37
    %p43 = scmp.eq.s32.totalorder %s10, 0
    %p44 = por %p42, %p43
    %p45 = scmp.ne.s32.totalorder %s34, %s37
    %p46 = scmp.eq.s32.totalorder %s15, 1
    %p47 = por %p45, %p46
    %p48 = scmp.ne.s32.totalorder %s37, %s38
    %p49 = scmp.eq.s32.totalorder %s15, 0
    %p50 = por %p48, %p49
    %p51 = scmp.ne.s32.totalorder %s37, %s38
    %p52 = scmp.eq.s32.totalorder %s16, 1
    %p53 = por %p51, %p52
    %p55 = scmp.ne.s32.totalorder %s38, %s54
    %p56 = scmp.eq.s32.totalorder %s16, 0
    %p57 = por %p55, %p56
    %s58 = ssub.s32 %s17, %s29
    %s59 = ssub.s32 %s18, %s25
    %s60 = sor.u32 %s58, %s59
    %p61 = scmp.eq.s32.totalorder %s60, 0
    %s63 = sadd.s32 %s62, 1
    %s64 = scalar_select %p61, %s62, %s63
    %p67 = pneg %p61
    %p68 = scmp.eq.s32.totalorder %s10, 1
    %p69 = por %p67, %p68
    %p70 = scmp.ne.s32.totalorder %s62, %s65
    %p71 = scmp.eq.s32.totalorder %s10, 0
    %p72 = por %p70, %p71
    %p73 = scmp.ne.s32.totalorder %s62, %s65
    %p74 = scmp.eq.s32.totalorder %s15, 1
    %p75 = por %p73, %p74
    %p76 = scmp.ne.s32.totalorder %s65, %s66
    %p77 = scmp.eq.s32.totalorder %s15, 0
    %p78 = por %p76, %p77
    %p79 = scmp.ne.s32.totalorder %s65, %s66
    %p80 = scmp.eq.s32.totalorder %s16, 1
    %p81 = por %p79, %p80
    %p83 = scmp.ne.s32.totalorder %s66, %s82
    %p84 = scmp.eq.s32.totalorder %s16, 0
    %p85 = por %p83, %p84
    %s86 = sadd.s32 %s17, %s18
    %s87 = sadd.s32 %s29, %s25
    %s88 = ssub.s32 %s86, %s87
    %p89 = scmp.eq.s32.totalorder %s88, 0
    %s91 = sadd.s32 %s90, 1
    %s92 = scalar_select %p89, %s90, %s91
    %p95 = pneg %p89
    %p96 = scmp.eq.s32.totalorder %s10, 1
    %p97 = por %p95, %p96
    %p98 = scmp.ne.s32.totalorder %s90, %s93
    %p99 = scmp.eq.s32.totalorder %s10, 0
    %p100 = por %p98, %p99
    %p101 = scmp.ne.s32.totalorder %s90, %s93
    %p102 = scmp.eq.s32.totalorder %s15, 1
    %p103 = por %p101, %p102
    %p104 = scmp.ne.s32.totalorder %s93, %s94
    %p105 = scmp.eq.s32.totalorder %s15, 0
    %p106 = por %p104, %p105
    %p107 = scmp.ne.s32.totalorder %s93, %s94
    %p108 = scmp.eq.s32.totalorder %s16, 1
    %p109 = por %p107, %p108
    %p111 = scmp.ne.s32.totalorder %s94, %s110
    %p112 = scmp.eq.s32.totalorder %s16, 0
    %p113 = por %p111, %p112
    %s114 = sadd.s32 %s17, %s18
    %s115 = sadd.s32 %s29, %s25
    %s116 = ssub.s32 %s114, %s115
    %p117 = scmp.eq.s32.totalorder %s116, 0
    %s119 = sadd.s32 %s118, 1
    %s120 = scalar_select %p117, %s118, %s119
    %p123 = pneg %p117
    %p124 = scmp.eq.s32.totalorder %s10, 1
    %p125 = por %p123, %p124
    %p126 = scmp.ne.s32.totalorder %s118, %s121
    %p127 = scmp.eq.s32.totalorder %s10, 0
    %p128 = por %p126, %p127
    %p129 = scmp.ne.s32.totalorder %s118, %s121
    %p130 = scmp.eq.s32.totalorder %s15, 1
    %p131 = por %p129, %p130
    %p132 = scmp.ne.s32.totalorder %s121, %s122
    %p133 = scmp.eq.s32.totalorder %s15, 0
    %p134 = por %p132, %p133
    %p135 = scmp.ne.s32.totalorder %s121, %s122
    %p136 = scmp.eq.s32.totalorder %s16, 1
    %p137 = por %p135, %p136
    %p139 = scmp.ne.s32.totalorder %s122, %s138
    %p140 = scmp.eq.s32.totalorder %s16, 0
    %p141 = por %p139, %p140
    %p142 = scmp.le.s32.totalorder 1, %s10
    %p143 = scmp.lt.s32.totalorder %s10, 3
    %p144 = pnand %p142, %p143
    %p145 = pneg %p144
    // Predicated region
    $region9: #{a_call__.2} parent=5 // pred_check
      _
    $region10: #{a_call__.2} parent=5 // pred_check_branch
      %147 = sbr.rel (%p144) target = $region12
    $region11: #{a_call__.2} parent=5 // pred_region
      %s148 = ssub.s32 %s10, 1
    $region12: #{a_call__.2} parent=5 // pred_fallthru
      _
    %p149 = scmp.lt.s32.totalorder %s10, 2
    // Predicated region
    $region13: #{a_call__.2} parent=5 // pred_check
      %p150 = pneg %p149
    $region14: #{a_call__.2} parent=5 // pred_check_branch
      %152 = sbr.rel (%p150) target = $region16
    $region15: #{a_call__.2} parent=5 // pred_region
      // Predicated region
      $region17: #{a_call__.2} parent=15 // pred_check
        %p153 = pneg %p44
      $region18: #{a_call__.2} parent=15 // pred_check_branch
        %155 = sbr.rel (%p153) target = $region20
      $region19: #{a_call__.2} parent=15 // pred_region
        %s156 = smul.u32 2, %s18
        %p157 = scmp.lt.s32.totalorder %s17, 1
        %s158 = scalar_select %p157, %s17, 1
        %p159 = scmp.lt.s32.totalorder %s156, 1
        %s160 = scalar_select %p159, %s156, 1
        %s161 = smul.addr %s158, 2
        %s162 = sadd.s32 %s160, %s161
        %s163 = smul.addr %s162, 4
        %s164 = scalar_lea.vmem %s0, %s163
        %s165 = smul.u32 2, %s18
      $region20: #{a_call__.2} parent=15 // pred_fallthru
        _
      // Predicated region
      $region21: #{a_call__.2} parent=15 // pred_check
        %p166 = pneg %p72
      $region22: #{a_call__.2} parent=15 // pred_check_branch
        %168 = sbr.rel (%p166) target = $region24
      $region23: #{a_call__.2} parent=15 // pred_region
        %s169 = smul.u32 2, %s18
        %p170 = scmp.lt.s32.totalorder %s17, 1
        %s171 = scalar_select %p170, %s17, 1
        %p172 = scmp.lt.s32.totalorder %s169, 1
        %s173 = scalar_select %p172, %s169, 1
        %s174 = smul.addr %s171, 2
        %s175 = sadd.s32 %s173, %s174
        %s176 = scalar_lea.vmem %s1, %s175
        %s177 = smul.u32 2, %s18
      $region24: #{a_call__.2} parent=15 // pred_fallthru
        _
    $region16: #{a_call__.2} parent=5 // pred_fallthru
      _
    %p178 = scmp.le.s32.totalorder 1, %s10
    %p179 = scmp.lt.s32.totalorder %s10, 3
    %p180 = pnand %p178, %p179
    %p181 = pneg %p180
    // Predicated region
    $region25: #{a_call__.2} parent=5 // pred_check
      _
    $region26: #{a_call__.2} parent=5 // pred_check_branch
      %183 = sbr.rel (%p180) target = $region28
    $region27: #{a_call__.2} parent=5 // pred_region
      %s184 = ssub.s32 %s10, 1
      %s185 = smul.u32 2, %s20
      %p186 = scmp.lt.s32.totalorder %s19, 1
      %s187 = scalar_select %p186, %s19, 1
      %p188 = scmp.lt.s32.totalorder %s185, 1
      %s189 = scalar_select %p188, %s185, 1
      %s190 = smul.addr %s187, 2
      %s191 = sadd.s32 %s189, %s190
      %s192 = smul.addr %s191, 4
      %s193 = scalar_lea.vmem %s0, %s192
      %p194 = pneg %p50
      %p195 = pneg %p47
      %s196 = smul.u32 2, %s20
      %p197 = scmp.lt.s32.totalorder %s19, 1
      %s198 = scalar_select %p197, %s19, 1
      %p199 = scmp.lt.s32.totalorder %s196, 1
      %s200 = scalar_select %p199, %s196, 1
      %s201 = smul.addr %s198, 2
      %s202 = sadd.s32 %s200, %s201
      %s203 = scalar_lea.vmem %s1, %s202
      %p204 = pneg %p78
      %p205 = pneg %p75
      %p206 = pneg %p106
      %p207 = pneg %p103
      %s208 = sadd.s32 %s19, %s20
      %s209 = smul.u32 2, %s208
      %p210 = scmp.lt.s32.totalorder %s209, 3
      %s211 = scalar_select %p210, %s209, 3
      %s212 = smul.addr %s211, 4
      %s213 = scalar_lea.vmem %s2, %s212
      %p214 = pneg %p134
      %p215 = pneg %p131
      %s216 = sadd.s32 %s19, %s20
      %s217 = smul.u32 2, %s216
      %p218 = scmp.lt.s32.totalorder %s217, 3
      %s219 = scalar_select %p218, %s217, 3
      %s220 = scalar_lea.vmem %s3, %s219
      %s221 = smul.u32 2, %s20
      %p222 = scmp.lt.s32.totalorder %s19, 1
      %s223 = scalar_select %p222, %s19, 1
      %p224 = scmp.lt.s32.totalorder %s221, 1
      %s225 = scalar_select %p224, %s221, 1
      %s226 = smul.addr %s223, 2
      %s227 = sadd.s32 %s225, %s226
      %s228 = smul.addr %s227, 4
      %s229 = scalar_lea.vmem %s0, %s228
      %s230 = smul.u32 2, %s20
      %s231 = smul.u32 2, %s20
      %p232 = scmp.lt.s32.totalorder %s19, 1
      %s233 = scalar_select %p232, %s19, 1
      %p234 = scmp.lt.s32.totalorder %s231, 1
      %s235 = scalar_select %p234, %s231, 1
      %s236 = smul.addr %s233, 2
      %s237 = sadd.s32 %s235, %s236
      %s238 = scalar_lea.vmem %s1, %s237
      %s239 = smul.u32 2, %s20
      %s240 = sadd.s32 %s19, %s20
      %s241 = smul.u32 2, %s240
      %p242 = scmp.lt.s32.totalorder %s241, 3
      %s243 = scalar_select %p242, %s241, 3
      %s244 = smul.addr %s243, 4
      %s245 = scalar_lea.vmem %s2, %s244
      %s246 = sadd.s32 %s19, %s20
      %s247 = smul.u32 2, %s246
      %s248 = sadd.s32 %s19, %s20
      %s249 = smul.u32 2, %s248
      %p250 = scmp.lt.s32.totalorder %s249, 3
      %s251 = scalar_select %p250, %s249, 3
      %s252 = scalar_lea.vmem %s3, %s251
      %s253 = sadd.s32 %s19, %s20
      %s254 = smul.u32 2, %s253
      %v257 = vld [vmem:[%s229] sm:$0xff]
      %v258 = vld [vmem:[%s238] sm:$0x3]
      %v260 = vcombine.high %v257, %v257
      %vm262 = vcmask 1043456
      %v263 = vsel %vm262, %v257, -inf
      %v264 = vrot.slane %v263, 4
      %v265 = vmax.f32 %v263, %v264
      %v266 = vrot.slane %v265, 2
      %v267 = vmax.f32 %v265, %v266
      %v268 = vrot.slane %v267, 1
      %v269 = vmax.f32 %v267, %v268
      %v270 = vsel %vm262, %v260, -inf
      %v271 = vrot.slane %v270, 4
      %v272 = vmax.f32 %v270, %v271
      %v273 = vrot.slane %v272, 2
      %v274 = vmax.f32 %v272, %v273
      %v275 = vrot.slane %v274, 1
      %v276 = vmax.f32 %v274, %v275
      %v279 = vcombine.low %v269, %v276
      %v281 = vsub.f32 %v257, %v279
      %v282 = vmul.f32 %v281, 1.442695
      %v283 = vpow.pop %v282
      %v285 = vcombine.high %v283, %v283
      %v287 = vsel %vm262, %v283, 0.0
      %v288 = vrot.slane %v287, 4
      %v289 = vadd.f32 %v287, %v288
      %v290 = vrot.slane %v289, 2
      %v291 = vadd.f32 %v289, %v290
      %v292 = vrot.slane %v291, 1
      %v293 = vadd.f32 %v291, %v292
      %v294 = vsel %vm262, %v285, 0.0
      %v295 = vrot.slane %v294, 4
      %v296 = vadd.f32 %v294, %v295
      %v297 = vrot.slane %v296, 2
      %v298 = vadd.f32 %v296, %v297
      %v299 = vrot.slane %v298, 1
      %v300 = vadd.f32 %v298, %v299
      %v303 = vcombine.low %v293, %v300
      %v305 = vrcp.pop %v303
      %v306 = vmul.f32 %v283, %v305
      %v307 = vlaneseq
      %v308 = vshrl.u32 %v307, 7
      %v309 = vlaneseq
      %v310 = vand.u32 %v309, 127
      %v311 = vadd.s32 %v310, 128
      %s312 = smul.u32 %s20, 256
      %v313 = vstv %s312
      %v314 = vadd.s32 %v310, %v313
      %v315 = vadd.s32 %v311, %v313
      %v316 = vlaneseq
      %v317 = vshrl.u32 %v316, 7
      %v318 = vsub.s32 0, %v317
      %v319 = vrot.slane %v258, %v318
      %v320 = vlaneseq
      %v321 = vshrl.u32 %v320, 7
      %v322 = vsub.s32 1, %v321
      %v323 = vrot.slane %v258, %v322
      %vm324 = vcmp.lt.s32.totalorder %v314, 256
      %vm325 = vcmp.lt.s32.totalorder %v315, 256
      %vm326 = vcmp.ne.s32.totalorder %v319, 255
      %vm327 = vcmp.ne.s32.totalorder %v323, 255
      %vm328 = vmand %vm324, %vm326
      %vm329 = vmand %vm325, %vm327
      %vm330 = vcmp.eq.s32.totalorder %v308, %v319
      %vm331 = vcmp.eq.s32.totalorder %v308, %v323
      %vm332 = vmand %vm328, %vm330
      %vm333 = vmand %vm329, %vm331
      %v334 = vsel %vm332, 1, 0
      %v335 = vsel %vm333, 1, 0
      %v336 = vcvt.s32.f32 %v334
      %v337 = vcvt.s32.f32 %v335
      %v339 = vcombine.high %v306, %v306
      %v341 = vsub.f32 %v336, %v306
      %v342 = vsub.f32 %v337, %v339
      %v343 = vand.u32 2147483647, %v341
      %v344 = vand.u32 2147483647, %v342
      %v345 = vsub.f32 0.0, %v343
      %v346 = vsub.f32 0.0, %v344
      %v347 = vsel %vm328, %v345, 0.0
      %v348 = vsel %vm329, %v346, 0.0
      %v351 = vcombine.low %v347, %v348
      %353 = vst [vmem:[%s245] sm:$0xff] %v351
      %vm354 = vmpackc.low %vm332, %vm332
      %vm355 = vmpackc.even %vm354, %vm354
      %vm356 = vmpackc.low %vm333, %vm333
      %vm357 = vmpackc.even %vm356, %vm356
      %v358 = vsel %vm355, 16843009, 0
      %v359 = vsel %vm357, 16843009, 0
      %v360 = vcombine.low %v358, %v359
      %v362 = vunpack.c.l.s4 1966171168
      %v363 = vunpack.c.0.s8 %v362
      %v364 = vlaneseq
      %v365 = vshrl.u32 %v364, 7
      %v366 = vsub.s32 %v363, %v365
      %v367 = vrot.slane %v360, %v366
      %v369 = vunpack.c.l.s4 1966171168
      %v370 = vunpack.c.0.s8 %v369
      %v371 = vlaneseq
      %v372 = vshrl.u32 %v371, 7
      %v373 = vsub.s32 %v370, %v372
      %v374 = vrot.slane %v367, %v373
      %375 = vst [vmem:[%s252] sm:$0x3] %v374
      %s376 = sadd.s32 %s19, %s20
      %s377 = smul.u32 2, %s376
      %p378 = scmp.lt.s32.totalorder %s377, 3
      %s379 = scalar_select %p378, %s377, 3
      %s380 = smul.addr %s379, 4
      %s381 = scalar_lea.vmem %s2, %s380
      %s382 = sadd.s32 %s19, %s20
      %s383 = smul.u32 2, %s382
      %p384 = scmp.lt.s32.totalorder %s383, 3
      %s385 = scalar_select %p384, %s383, 3
      %s386 = scalar_lea.vmem %s3, %s385
      // Predicated region
      $region29: #{a_call__.2} parent=27 // pred_check
        %p387 = pneg %p103
      $region30: #{a_call__.2} parent=27 // pred_check_branch
        %389 = sbr.rel (%p387) target = $region32
      $region31: #{a_call__.2} parent=27 // pred_region
        %s390 = sadd.s32 %s19, %s20
        %s391 = smul.u32 2, %s390
      $region32: #{a_call__.2} parent=27 // pred_fallthru
        _
      // Predicated region
      $region33: #{a_call__.2} parent=27 // pred_check
        %p392 = pneg %p131
      $region34: #{a_call__.2} parent=27 // pred_check_branch
        %394 = sbr.rel (%p392) target = $region36
      $region35: #{a_call__.2} parent=27 // pred_region
        %s395 = sadd.s32 %s19, %s20
        %s396 = smul.u32 2, %s395
      $region36: #{a_call__.2} parent=27 // pred_fallthru
        _
    $region28: #{a_call__.2} parent=5 // pred_fallthru
      _
    %p397 = scmp.le.s32.totalorder 2, %s10
    // Predicated region
    $region37: #{a_call__.2} parent=5 // pred_check
      %p398 = pneg %p397
    $region38: #{a_call__.2} parent=5 // pred_check_branch
      %400 = sbr.rel (%p398) target = $region40
    $region39: #{a_call__.2} parent=5 // pred_region
      %s401 = ssub.s32 %s10, 2
      // Predicated region
      $region41: #{a_call__.2} parent=39 // pred_check
        %p402 = pneg %p109
      $region42: #{a_call__.2} parent=39 // pred_check_branch
        %404 = sbr.rel (%p402) target = $region44
      $region43: #{a_call__.2} parent=39 // pred_region
        %s405 = sadd.s32 %s21, %s22
        %s406 = smul.u32 2, %s405
        %p407 = scmp.lt.s32.totalorder %s406, 3
        %s408 = scalar_select %p407, %s406, 3
        %s409 = smul.addr %s408, 4
        %s410 = scalar_lea.vmem %s2, %s409
      $region44: #{a_call__.2} parent=39 // pred_fallthru
        _
      // Predicated region
      $region45: #{a_call__.2} parent=39 // pred_check
        %p411 = pneg %p137
      $region46: #{a_call__.2} parent=39 // pred_check_branch
        %413 = sbr.rel (%p411) target = $region48
      $region47: #{a_call__.2} parent=39 // pred_region
        %s414 = sadd.s32 %s21, %s22
        %s415 = smul.u32 2, %s414
        %p416 = scmp.lt.s32.totalorder %s415, 3
        %s417 = scalar_select %p416, %s415, 3
        %s418 = scalar_lea.vmem %s3, %s417
      $region48: #{a_call__.2} parent=39 // pred_fallthru
        _
    $region40: #{a_call__.2} parent=5 // pred_fallthru
      _
  $region6: #{a_call__.2} parent=0 // loop_footer
    %s14 = sadd.s32 1, %s10
  $region7: #{a_call__.2} parent=0 // loop_footer_branch
    %9 = sbr.rel target = $region3
  $region8: #{a_call__.2} parent=0 // loop_exit
    _

// kernel: a_call__.3
$region0: #{a_call__.3}
  #allocation0 [shape = 'u32[]', space=smem, size = 0x4, offset = 0x4, fixed_abs, tag = 'smem constant byte address 0x4 - core index']
  #allocation1 [shape = 'u32[144,128]{1,0:T(1,128)}', space=vmem, size = 0x12000, scoped, tag = 'internal scratch']
  #allocation2 [shape = 'f32[4,1]{1,0:T(4,128)}', space=vmem, size = 0x800, scoped, tag = 'scratch operand']
  #allocation3 [shape = 'bf16[256,256]{1,0:T(16,128)(2,1)}', space=vmem, size = 0x20000, scoped, tag = 'scratch operand']
  %s0 = inlined_call_operand.vmem [shape: f32[4,1], index: 0, kind: input, shape index: {}]
  %s1 = inlined_call_operand.vmem [shape: f32[4,512], index: 1, kind: input, shape index: {}]
  %s2 = inlined_call_operand.vmem [shape: s8[4,512], index: 2, kind: input, shape index: {}]
  %s3 = inlined_call_operand.vmem [shape: f32[4,1], index: 3, kind: output, shape index: {}]
  %s4 = sld [smem:[#allocation0]]
  $region26: #{a_call__.3} parent=0
    _
  %s6 = ssub.s32 1, %s4
  %s7 = scalar_select 0, %s6, %s4
  // Predicated region
  $region2: #{a_call__.3} parent=0 // pred_check
    _
  $region3: #{a_call__.3} parent=0 // pred_check_branch
    %9 = sbr.rel (0) target = $region5
  $region4: #{a_call__.3} parent=0 // pred_region
    _
  $region5: #{a_call__.3} parent=0 // pred_fallthru
    _
  // Predicated region
  $region6: #{a_call__.3} parent=0 // pred_check
    _
  $region7: #{a_call__.3} parent=0 // pred_check_branch
    %11 = sbr.rel (0) target = $region9
  $region8: #{a_call__.3} parent=0 // pred_region
    _
  $region9: #{a_call__.3} parent=0 // pred_fallthru
    _
  // Predicated region
  $region10: #{a_call__.3} parent=0 // pred_check
    _
  $region11: #{a_call__.3} parent=0 // pred_check_branch
    %13 = sbr.rel (0) target = $region13
  $region12: #{a_call__.3} parent=0 // pred_region
    _
  $region13: #{a_call__.3} parent=0 // pred_fallthru
    _
  %p14 = scmp.eq.s32.totalorder 0, 0
  // Predicated region
  $region14: #{a_call__.3} parent=0 // pred_check
    %p15 = pneg %p14
  $region15: #{a_call__.3} parent=0 // pred_check_branch
    %17 = sbr.rel (%p15) target = $region17
  $region16: #{a_call__.3} parent=0 // pred_region
    %vm18 = vcmask 3072
    %19 = vst.msk [vmem:[%s3] sm:$0xf] %vm18, 0.0
    %20 = vst.msk [vmem:[#allocation2] sm:$0xf] %vm18, 0.0
    %v21 = vlaneseq
    %v22 = vshrl.u32 %v21, 7
    %v23 = vadd.s32 %v22, 8
    %v24 = vadd.s32 %v22, 16
    %v25 = vadd.s32 %v22, 24
    %v26 = vadd.s32 %v22, 32
    %v27 = vadd.s32 %v22, 40
    %v28 = vadd.s32 %v22, 48
    %v29 = vadd.s32 %v22, 56
    %v30 = vadd.s32 %v22, 64
    %v31 = vadd.s32 %v22, 72
    %v32 = vadd.s32 %v22, 80
    %v33 = vadd.s32 %v22, 88
    %v34 = vadd.s32 %v22, 96
    %v35 = vadd.s32 %v22, 104
    %v36 = vadd.s32 %v22, 112
    %v37 = vadd.s32 %v22, 120
    %v38 = vadd.s32 %v22, 128
    %v39 = vadd.s32 %v22, 136
    %v40 = vadd.s32 %v22, 144
    %v41 = vadd.s32 %v22, 152
    %v42 = vadd.s32 %v22, 160
    %v43 = vadd.s32 %v22, 168
    %v44 = vadd.s32 %v22, 176
    %v45 = vadd.s32 %v22, 184
    %v46 = vadd.s32 %v22, 192
    %v47 = vadd.s32 %v22, 200
    %v48 = vadd.s32 %v22, 208
    %v49 = vadd.s32 %v22, 216
    %v50 = vadd.s32 %v22, 224
    %v51 = vadd.s32 %v22, 232
    %v52 = vadd.s32 %v22, 240
    %v53 = vadd.s32 %v22, 248
    %v54 = vlaneseq
    %v55 = vand.u32 %v54, 127
    %v56 = vadd.s32 %v55, 128
    %vm57 = vcmp.le.s32.totalorder %v22, %v55
    %vm58 = vcmp.le.s32.totalorder %v22, %v56
    %vm59 = vcmp.le.s32.totalorder %v23, %v55
    %vm60 = vcmp.le.s32.totalorder %v23, %v56
    %vm61 = vcmp.le.s32.totalorder %v24, %v55
    %vm62 = vcmp.le.s32.totalorder %v24, %v56
    %vm63 = vcmp.le.s32.totalorder %v25, %v55
    %vm64 = vcmp.le.s32.totalorder %v25, %v56
    %vm65 = vcmp.le.s32.totalorder %v26, %v55
    %vm66 = vcmp.le.s32.totalorder %v26, %v56
    %vm67 = vcmp.le.s32.totalorder %v27, %v55
    %vm68 = vcmp.le.s32.totalorder %v27, %v56
    %vm69 = vcmp.le.s32.totalorder %v28, %v55
    %vm70 = vcmp.le.s32.totalorder %v28, %v56
    %vm71 = vcmp.le.s32.totalorder %v29, %v55
    %vm72 = vcmp.le.s32.totalorder %v29, %v56
    %vm73 = vcmp.le.s32.totalorder %v30, %v55
    %vm74 = vcmp.le.s32.totalorder %v30, %v56
    %vm75 = vcmp.le.s32.totalorder %v31, %v55
    %vm76 = vcmp.le.s32.totalorder %v31, %v56
    %vm77 = vcmp.le.s32.totalorder %v32, %v55
    %vm78 = vcmp.le.s32.totalorder %v32, %v56
    %vm79 = vcmp.le.s32.totalorder %v33, %v55
    %vm80 = vcmp.le.s32.totalorder %v33, %v56
    %vm81 = vcmp.le.s32.totalorder %v34, %v55
    %vm82 = vcmp.le.s32.totalorder %v34, %v56
    %vm83 = vcmp.le.s32.totalorder %v35, %v55
    %vm84 = vcmp.le.s32.totalorder %v35, %v56
    %vm85 = vcmp.le.s32.totalorder %v36, %v55
    %vm86 = vcmp.le.s32.totalorder %v36, %v56
    %vm87 = vcmp.le.s32.totalorder %v37, %v55
    %vm88 = vcmp.le.s32.totalorder %v37, %v56
    %vm89 = vcmp.le.s32.totalorder %v38, %v55
    %vm90 = vcmp.le.s32.totalorder %v38, %v56
    %vm91 = vcmp.le.s32.totalorder %v39, %v55
    %vm92 = vcmp.le.s32.totalorder %v39, %v56
    %vm93 = vcmp.le.s32.totalorder %v40, %v55
    %vm94 = vcmp.le.s32.totalorder %v40, %v56
    %vm95 = vcmp.le.s32.totalorder %v41, %v55
    %vm96 = vcmp.le.s32.totalorder %v41, %v56
    %vm97 = vcmp.le.s32.totalorder %v42, %v55
    %vm98 = vcmp.le.s32.totalorder %v42, %v56
    %vm99 = vcmp.le.s32.totalorder %v43, %v55
    %vm100 = vcmp.le.s32.totalorder %v43, %v56
    %vm101 = vcmp.le.s32.totalorder %v44, %v55
    %vm102 = vcmp.le.s32.totalorder %v44, %v56
    %vm103 = vcmp.le.s32.totalorder %v45, %v55
    %vm104 = vcmp.le.s32.totalorder %v45, %v56
    %vm105 = vcmp.le.s32.totalorder %v46, %v55
    %vm106 = vcmp.le.s32.totalorder %v46, %v56
    %vm107 = vcmp.le.s32.totalorder %v47, %v55
    %vm108 = vcmp.le.s32.totalorder %v47, %v56
    %vm109 = vcmp.le.s32.totalorder %v48, %v55
    %vm110 = vcmp.le.s32.totalorder %v48, %v56
    %vm111 = vcmp.le.s32.totalorder %v49, %v55
    %vm112 = vcmp.le.s32.totalorder %v49, %v56
    %vm113 = vcmp.le.s32.totalorder %v50, %v55
    %vm114 = vcmp.le.s32.totalorder %v50, %v56
    %vm115 = vcmp.le.s32.totalorder %v51, %v55
    %vm116 = vcmp.le.s32.totalorder %v51, %v56
    %vm117 = vcmp.le.s32.totalorder %v52, %v55
    %vm118 = vcmp.le.s32.totalorder %v52, %v56
    %vm119 = vcmp.le.s32.totalorder %v53, %v55
    %vm120 = vcmp.le.s32.totalorder %v53, %v56
    %v121 = vsel %vm57, 1, 0
    %v122 = vsel %vm58, 1, 0
    %v123 = vsel %vm59, 1, 0
    %v124 = vsel %vm60, 1, 0
    %v125 = vsel %vm61, 1, 0
    %v126 = vsel %vm62, 1, 0
    %v127 = vsel %vm63, 1, 0
    %v128 = vsel %vm64, 1, 0
    %v129 = vsel %vm65, 1, 0
    %v130 = vsel %vm66, 1, 0
    %v131 = vsel %vm67, 1, 0
    %v132 = vsel %vm68, 1, 0
    %v133 = vsel %vm69, 1, 0
    %v134 = vsel %vm70, 1, 0
    %v135 = vsel %vm71, 1, 0
    %v136 = vsel %vm72, 1, 0
    %v137 = vsel %vm73, 1, 0
    %v138 = vsel %vm74, 1, 0
    %v139 = vsel %vm75, 1, 0
    %v140 = vsel %vm76, 1, 0
    %v141 = vsel %vm77, 1, 0
    %v142 = vsel %vm78, 1, 0
    %v143 = vsel %vm79, 1, 0
    %v144 = vsel %vm80, 1, 0
    %v145 = vsel %vm81, 1, 0
    %v146 = vsel %vm82, 1, 0
    %v147 = vsel %vm83, 1, 0
    %v148 = vsel %vm84, 1, 0
    %v149 = vsel %vm85, 1, 0
    %v150 = vsel %vm86, 1, 0
    %v151 = vsel %vm87, 1, 0
    %v152 = vsel %vm88, 1, 0
    %v153 = vsel %vm89, 1, 0
    %v154 = vsel %vm90, 1, 0
    %v155 = vsel %vm91, 1, 0
    %v156 = vsel %vm92, 1, 0
    %v157 = vsel %vm93, 1, 0
    %v158 = vsel %vm94, 1, 0
    %v159 = vsel %vm95, 1, 0
    %v160 = vsel %vm96, 1, 0
    %v161 = vsel %vm97, 1, 0
    %v162 = vsel %vm98, 1, 0
    %v163 = vsel %vm99, 1, 0
    %v164 = vsel %vm100, 1, 0
    %v165 = vsel %vm101, 1, 0
    %v166 = vsel %vm102, 1, 0
    %v167 = vsel %vm103, 1, 0
    %v168 = vsel %vm104, 1, 0
    %v169 = vsel %vm105, 1, 0
    %v170 = vsel %vm106, 1, 0
    %v171 = vsel %vm107, 1, 0
    %v172 = vsel %vm108, 1, 0
    %v173 = vsel %vm109, 1, 0
    %v174 = vsel %vm110, 1, 0
    %v175 = vsel %vm111, 1, 0
    %v176 = vsel %vm112, 1, 0
    %v177 = vsel %vm113, 1, 0
    %v178 = vsel %vm114, 1, 0
    %v179 = vsel %vm115, 1, 0
    %v180 = vsel %vm116, 1, 0
    %v181 = vsel %vm117, 1, 0
    %v182 = vsel %vm118, 1, 0
    %v183 = vsel %vm119, 1, 0
    %v184 = vsel %vm120, 1, 0
    %v185 = vcvt.s32.f32 %v121
    %v186 = vcvt.s32.f32 %v122
    %v187 = vcvt.s32.f32 %v123
    %v188 = vcvt.s32.f32 %v124
    %v189 = vcvt.s32.f32 %v125
    %v190 = vcvt.s32.f32 %v126
    %v191 = vcvt.s32.f32 %v127
    %v192 = vcvt.s32.f32 %v128
    %v193 = vcvt.s32.f32 %v129
    %v194 = vcvt.s32.f32 %v130
    %v195 = vcvt.s32.f32 %v131
    %v196 = vcvt.s32.f32 %v132
    %v197 = vcvt.s32.f32 %v133
    %v198 = vcvt.s32.f32 %v134
    %v199 = vcvt.s32.f32 %v135
    %v200 = vcvt.s32.f32 %v136
    %v201 = vcvt.s32.f32 %v137
    %v202 = vcvt.s32.f32 %v138
    %v203 = vcvt.s32.f32 %v139
    %v204 = vcvt.s32.f32 %v140
    %v205 = vcvt.s32.f32 %v141
    %v206 = vcvt.s32.f32 %v142
    %v207 = vcvt.s32.f32 %v143
    %v208 = vcvt.s32.f32 %v144
    %v209 = vcvt.s32.f32 %v145
    %v210 = vcvt.s32.f32 %v146
    %v211 = vcvt.s32.f32 %v147
    %v212 = vcvt.s32.f32 %v148
    %v213 = vcvt.s32.f32 %v149
    %v214 = vcvt.s32.f32 %v150
    %v215 = vcvt.s32.f32 %v151
    %v216 = vcvt.s32.f32 %v152
    %v217 = vcvt.s32.f32 %v153
    %v218 = vcvt.s32.f32 %v154
    %v219 = vcvt.s32.f32 %v155
    %v220 = vcvt.s32.f32 %v156
    %v221 = vcvt.s32.f32 %v157
    %v222 = vcvt.s32.f32 %v158
    %v223 = vcvt.s32.f32 %v159
    %v224 = vcvt.s32.f32 %v160
    %v225 = vcvt.s32.f32 %v161
    %v226 = vcvt.s32.f32 %v162
    %v227 = vcvt.s32.f32 %v163
    %v228 = vcvt.s32.f32 %v164
    %v229 = vcvt.s32.f32 %v165
    %v230 = vcvt.s32.f32 %v166
    %v231 = vcvt.s32.f32 %v167
    %v232 = vcvt.s32.f32 %v168
    %v233 = vcvt.s32.f32 %v169
    %v234 = vcvt.s32.f32 %v170
    %v235 = vcvt.s32.f32 %v171
    %v236 = vcvt.s32.f32 %v172
    %v237 = vcvt.s32.f32 %v173
    %v238 = vcvt.s32.f32 %v174
    %v239 = vcvt.s32.f32 %v175
    %v240 = vcvt.s32.f32 %v176
    %v241 = vcvt.s32.f32 %v177
    %v242 = vcvt.s32.f32 %v178
    %v243 = vcvt.s32.f32 %v179
    %v244 = vcvt.s32.f32 %v180
    %v245 = vcvt.s32.f32 %v181
    %v246 = vcvt.s32.f32 %v182
    %v247 = vcvt.s32.f32 %v183
    %v248 = vcvt.s32.f32 %v184
    %v249 = vpack.c.bf16 %v187, %v185
    %v250 = vpack.c.bf16 %v188, %v186
    %v251 = vpack.c.bf16 %v191, %v189
    %v252 = vpack.c.bf16 %v192, %v190
    %v253 = vpack.c.bf16 %v195, %v193
    %v254 = vpack.c.bf16 %v196, %v194
    %v255 = vpack.c.bf16 %v199, %v197
    %v256 = vpack.c.bf16 %v200, %v198
    %v257 = vpack.c.bf16 %v203, %v201
    %v258 = vpack.c.bf16 %v204, %v202
    %v259 = vpack.c.bf16 %v207, %v205
    %v260 = vpack.c.bf16 %v208, %v206
    %v261 = vpack.c.bf16 %v211, %v209
    %v262 = vpack.c.bf16 %v212, %v210
    %v263 = vpack.c.bf16 %v215, %v213
    %v264 = vpack.c.bf16 %v216, %v214
    %v265 = vpack.c.bf16 %v219, %v217
    %v266 = vpack.c.bf16 %v220, %v218
    %v267 = vpack.c.bf16 %v223, %v221
    %v268 = vpack.c.bf16 %v224, %v222
    %v269 = vpack.c.bf16 %v227, %v225
    %v270 = vpack.c.bf16 %v228, %v226
    %v271 = vpack.c.bf16 %v231, %v229
    %v272 = vpack.c.bf16 %v232, %v230
    %v273 = vpack.c.bf16 %v235, %v233
    %v274 = vpack.c.bf16 %v236, %v234
    %v275 = vpack.c.bf16 %v239, %v237
    %v276 = vpack.c.bf16 %v240, %v238
    %v277 = vpack.c.bf16 %v243, %v241
    %v278 = vpack.c.bf16 %v244, %v242
    %v279 = vpack.c.bf16 %v247, %v245
    %v280 = vpack.c.bf16 %v248, %v246
    %281 = vst [vmem:[#allocation3] sm:$0xff] %v249
    %282 = vst [vmem:[#allocation3 + $0x8] sm:$0xff] %v250
    %283 = vst [vmem:[#allocation3 + $0x10] sm:$0xff] %v251
    %284 = vst [vmem:[#allocation3 + $0x18] sm:$0xff] %v252
    %285 = vst [vmem:[#allocation3 + $0x20] sm:$0xff] %v253
    %286 = vst [vmem:[#allocation3 + $0x28] sm:$0xff] %v254
    %287 = vst [vmem:[#allocation3 + $0x30] sm:$0xff] %v255
    %288 = vst [vmem:[#allocation3 + $0x38] sm:$0xff] %v256
    %289 = vst [vmem:[#allocation3 + $0x40] sm:$0xff] %v257
    %290 = vst [vmem:[#allocation3 + $0x48] sm:$0xff] %v258
    %291 = vst [vmem:[#allocation3 + $0x50] sm:$0xff] %v259
    %292 = vst [vmem:[#allocation3 + $0x58] sm:$0xff] %v260
    %293 = vst [vmem:[#allocation3 + $0x60] sm:$0xff] %v261
    %294 = vst [vmem:[#allocation3 + $0x68] sm:$0xff] %v262
    %295 = vst [vmem:[#allocation3 + $0x70] sm:$0xff] %v263
    %296 = vst [vmem:[#allocation3 + $0x78] sm:$0xff] %v264
    %297 = vst [vmem:[#allocation3 + $0x80] sm:$0xff] %v265
    %298 = vst [vmem:[#allocation3 + $0x88] sm:$0xff] %v266
    %299 = vst [vmem:[#allocation3 + $0x90] sm:$0xff] %v267
    %300 = vst [vmem:[#allocation3 + $0x98] sm:$0xff] %v268
    %301 = vst [vmem:[#allocation3 + $0xa0] sm:$0xff] %v269
    %302 = vst [vmem:[#allocation3 + $0xa8] sm:$0xff] %v270
    %303 = vst [vmem:[#allocation3 + $0xb0] sm:$0xff] %v271
    %304 = vst [vmem:[#allocation3 + $0xb8] sm:$0xff] %v272
    %305 = vst [vmem:[#allocation3 + $0xc0] sm:$0xff] %v273
    %306 = vst [vmem:[#allocation3 + $0xc8] sm:$0xff] %v274
    %307 = vst [vmem:[#allocation3 + $0xd0] sm:$0xff] %v275
    %308 = vst [vmem:[#allocation3 + $0xd8] sm:$0xff] %v276
    %309 = vst [vmem:[#allocation3 + $0xe0] sm:$0xff] %v277
    %310 = vst [vmem:[#allocation3 + $0xe8] sm:$0xff] %v278
    %311 = vst [vmem:[#allocation3 + $0xf0] sm:$0xff] %v279
    %312 = vst [vmem:[#allocation3 + $0xf8] sm:$0xff] %v280
  $region17: #{a_call__.3} parent=0 // pred_fallthru
    _
  %v313 = vld [vmem:[%s0] sm:$0xf]
  %v314 = vld [vmem:[#allocation3] sm:$0xff]
  %v315 = vld [vmem:[#allocation3 + $0x8] sm:$0xff]
  %v316 = vld [vmem:[#allocation3 + $0x10] sm:$0xff]
  %v317 = vld [vmem:[#allocation3 + $0x18] sm:$0xff]
  %v318 = vld [vmem:[#allocation3 + $0x20] sm:$0xff]
  %v319 = vld [vmem:[#allocation3 + $0x28] sm:$0xff]
  %v320 = vld [vmem:[#allocation3 + $0x30] sm:$0xff]
  %v321 = vld [vmem:[#allocation3 + $0x38] sm:$0xff]
  %v322 = vld [vmem:[#allocation3 + $0x40] sm:$0xff]
  %v323 = vld [vmem:[#allocation3 + $0x48] sm:$0xff]
  %v324 = vld [vmem:[#allocation3 + $0x50] sm:$0xff]
  %v325 = vld [vmem:[#allocation3 + $0x58] sm:$0xff]
  %v326 = vld [vmem:[#allocation3 + $0x60] sm:$0xff]
  %v327 = vld [vmem:[#allocation3 + $0x68] sm:$0xff]
  %v328 = vld [vmem:[#allocation3 + $0x70] sm:$0xff]
  %v329 = vld [vmem:[#allocation3 + $0x78] sm:$0xff]
  %v330 = vld [vmem:[#allocation3 + $0x80] sm:$0xff]
  %v331 = vld [vmem:[#allocation3 + $0x88] sm:$0xff]
  %v332 = vld [vmem:[#allocation3 + $0x90] sm:$0xff]
  %v333 = vld [vmem:[#allocation3 + $0x98] sm:$0xff]
  %v334 = vld [vmem:[#allocation3 + $0xa0] sm:$0xff]
  %v335 = vld [vmem:[#allocation3 + $0xa8] sm:$0xff]
  %v336 = vld [vmem:[#allocation3 + $0xb0] sm:$0xff]
  %v337 = vld [vmem:[#allocation3 + $0xb8] sm:$0xff]
  %v338 = vld [vmem:[#allocation3 + $0xc0] sm:$0xff]
  %v339 = vld [vmem:[#allocation3 + $0xc8] sm:$0xff]
  %v340 = vld [vmem:[#allocation3 + $0xd0] sm:$0xff]
  %v341 = vld [vmem:[#allocation3 + $0xd8] sm:$0xff]
  %v342 = vld [vmem:[#allocation3 + $0xe0] sm:$0xff]
  %v343 = vld [vmem:[#allocation3 + $0xe8] sm:$0xff]
  %v344 = vld [vmem:[#allocation3 + $0xf0] sm:$0xff]
  %v345 = vld [vmem:[#allocation3 + $0xf8] sm:$0xff]
  %v346 = vld [vmem:[#allocation2] sm:$0xf]
  %s347 = smul.u32 0, 512
  %v348 = vld [vmem:[%s2] sm:$0x3]
  %v349 = vunpack.c.0.s8 %v348
  %v350 = vcvt.s32.f32 %v349
  %v351 = vld [vmem:[%s1] sm:$0xff]
  %v353 = vunpack.c.l.s4 1935823168
  %v354 = vunpack.c.0.s8 %v353
  %v355 = vlaneseq
  %v356 = vshrl.u32 %v355, 7
  %v357 = vsub.s32 %v354, %v356
  %v358 = vrot.slane %v348, %v357
  %v359 = vunpack.c.l.s8.bf16 %v358
  %v361 = vunpack.c.l.b16 %v359
  %v362 = vunpack.c.h.b16 %v359
  %v363 = vpack.c.b16 %v361, %v361
  %v364 = vpack.c.b16 %v362, %v362
  %367 = vmatprep.subr.bf16.mxu0 %v315
  %368 = vmatpush1.bf16.msra.mxu0 %v314
  %369 = vmatprep.subr.bf16.mxu0 %v317
  %370 = vmatpush1.bf16.msra.mxu0 %v316
  %371 = vmatprep.subr.bf16.mxu0 %v319
  %372 = vmatpush1.bf16.msra.mxu0 %v318
  %373 = vmatprep.subr.bf16.mxu0 %v321
  %374 = vmatpush1.bf16.msra.mxu0 %v320
  %375 = vmatprep.subr.bf16.mxu0 %v323
  %376 = vmatpush1.bf16.msra.mxu0 %v322
  %377 = vmatprep.subr.bf16.mxu0 %v325
  %378 = vmatpush1.bf16.msra.mxu0 %v324
  %379 = vmatprep.subr.bf16.mxu0 %v327
  %380 = vmatpush1.bf16.msra.mxu0 %v326
  %381 = vmatprep.subr.bf16.mxu0 %v329
  %382 = vmatpush1.bf16.msra.mxu0 %v328
  %383 = vmatprep.subr.bf16.mxu0 %v331
  %384 = vmatpush1.bf16.msra.mxu0 %v330
  %385 = vmatprep.subr.bf16.mxu0 %v333
  %386 = vmatpush1.bf16.msra.mxu0 %v332
  %387 = vmatprep.subr.bf16.mxu0 %v335
  %388 = vmatpush1.bf16.msra.mxu0 %v334
  %389 = vmatprep.subr.bf16.mxu0 %v337
  %390 = vmatpush1.bf16.msra.mxu0 %v336
  %391 = vmatprep.subr.bf16.mxu0 %v339
  %392 = vmatpush1.bf16.msra.mxu0 %v338
  %393 = vmatprep.subr.bf16.mxu0 %v341
  %394 = vmatpush1.bf16.msra.mxu0 %v340
  %395 = vmatprep.subr.bf16.mxu0 %v343
  %396 = vmatpush1.bf16.msra.mxu0 %v342
  %397 = vmatprep.subr.bf16.mxu0 %v345
  %398 = vmatpush1.bf16.msra.mxu0 %v344
  %399 = vmatprep.mubr.bf16.mxu0 %v364
  %400 = vmatmul.mubr.bf16.gmra.mrb[0].mxu0 %v363
  %v401 = vpop.f32.mrb[0].mxu0
  %v402 = vadd.f32 0.0, %v401
  %v403 = vpop.f32.mrb[0].mxu0
  %v404 = vadd.f32 0.0, %v403
  %v405 = vpop.f32.mrb[0].mxu0
  %v406 = vpop.f32.mrb[0].mxu0
  %407 = vdwg.mxu0
  %409 = vset.pattern.permute.xlu0 0
  %410 = vperm.xlu0 %409, %v346
  %v411 = vpop.permute.xlu0 %410
  %v413 = vadd.f32 %v411, %v402
  %v414 = vadd.f32 %v411, %v404
  %v415 = vlaneseq
  %v416 = vand.u32 %v415, 127
  %v417 = vadd.s32 %v416, 128
  %v418 = vstv %s347
  %v419 = vadd.s32 %v416, %v418
  %v420 = vadd.s32 %v417, %v418
  %v421 = vadd.s32 %v419, 1
  %v422 = vadd.s32 %v420, 1
  %v423 = vcvt.s32.f32 %v421
  %v424 = vcvt.s32.f32 %v422
  %v426 = vcombine.high %v350, %v350
  %v428 = vsub.f32 %v413, %v350
  %v429 = vsub.f32 %v414, %v426
  %431 = vset.pattern.permute.xlu0 0
  %432 = vperm.xlu0 %431, %v313
  %v433 = vpop.permute.xlu0 %432
  %v435 = vsub.f32 %v433, %v413
  %v436 = vsub.f32 %v433, %v414
  %v437 = vadd.f32 %v433, %v423
  %v438 = vadd.f32 %v433, %v424
  %v439 = vsub.f32 %v437, %v413
  %v440 = vsub.f32 %v438, %v414
  %v441 = vrcp.pop %v439
  %v442 = vmul.f32 %v435, %v441
  %v443 = vrcp.pop %v440
  %v444 = vmul.f32 %v436, %v443
  %v445 = vsub.f32 1.0, %v442
  %v446 = vsub.f32 1.0, %v444
  %vm447 = vcmp.le.f32.partialorder %v423, 1.0
  %vm448 = vcmp.le.f32.partialorder %v424, 1.0
  %v449 = vsub.f32 %v423, 1.0
  %v450 = vsub.f32 %v424, 1.0
  %v451 = vadd.f32 %v433, %v449
  %v452 = vadd.f32 %v433, %v450
  %v453 = vsub.f32 %v451, %v428
  %v454 = vsub.f32 %v452, %v429
  %v455 = vsel %vm447, 1.0, %v453
  %v456 = vsel %vm448, 1.0, %v454
  %v457 = vsub.f32 %v433, %v428
  %v458 = vsub.f32 %v433, %v429
  %v459 = vrcp.pop %v455
  %v460 = vmul.f32 %v457, %v459
  %v461 = vrcp.pop %v456
  %v462 = vmul.f32 %v458, %v461
  %v463 = vsub.f32 1.0, %v460
  %v464 = vsub.f32 1.0, %v462
  %v465 = vsel %vm447, 0.0, %v463
  %v466 = vsel %vm448, 0.0, %v464
  %v467 = vsub.f32 %v445, %v465
  %v468 = vsub.f32 %v446, %v466
  %v471 = vcombine.low %v467, %v468
  %v473 = vmul.f32 %v351, %v471
  %v475 = vcombine.high %v473, %v473
  %vm477 = vcmask 1043456
  %v478 = vsel %vm477, %v473, 0.0
  %v479 = vsel %vm477, %v475, 0.0
  %v480 = vadd.f32 %v478, %v479
  %481 = vadd.xlane.f32.xlu0 %v480
  %v482 = vpop.xlane.xlu0 %481
  %v483 = vsub.f32 0.0, %v482
  %v484 = vsel %vm477, %v350, 0.0
  %v485 = vsel %vm477, %v426, 0.0
  %v486 = vadd.f32 %v484, %v485
  %487 = vadd.xlane.f32.xlu0 %v486
  %v488 = vpop.xlane.xlu0 %487
  %v489 = vadd.f32 %v346, %v488
  %v490 = vld [vmem:[%s2 + $0x2] sm:$0x3]
  %v491 = vunpack.c.0.s8 %v490
  %v492 = vcvt.s32.f32 %v491
  %v493 = vld [vmem:[%s1 + $0x8] sm:$0xff]
  %v495 = vunpack.c.l.s4 1935823168
  %v496 = vunpack.c.0.s8 %v495
  %v497 = vlaneseq
  %v498 = vshrl.u32 %v497, 7
  %v499 = vsub.s32 %v496, %v498
  %v500 = vrot.slane %v490, %v499
  %v501 = vunpack.c.l.s8.bf16 %v500
  %v503 = vunpack.c.l.b16 %v501
  %v504 = vunpack.c.h.b16 %v501
  %v505 = vpack.c.b16 %v503, %v503
  %v506 = vpack.c.b16 %v504, %v504
  %509 = vmatprep.subr.bf16.mxu0 %v315
  %510 = vmatpush1.bf16.msra.mxu0 %v314
  %511 = vmatprep.subr.bf16.mxu0 %v317
  %512 = vmatpush1.bf16.msra.mxu0 %v316
  %513 = vmatprep.subr.bf16.mxu0 %v319
  %514 = vmatpush1.bf16.msra.mxu0 %v318
  %515 = vmatprep.subr.bf16.mxu0 %v321
  %516 = vmatpush1.bf16.msra.mxu0 %v320
  %517 = vmatprep.subr.bf16.mxu0 %v323
  %518 = vmatpush1.bf16.msra.mxu0 %v322
  %519 = vmatprep.subr.bf16.mxu0 %v325
  %520 = vmatpush1.bf16.msra.mxu0 %v324
  %521 = vmatprep.subr.bf16.mxu0 %v327
  %522 = vmatpush1.bf16.msra.mxu0 %v326
  %523 = vmatprep.subr.bf16.mxu0 %v329
  %524 = vmatpush1.bf16.msra.mxu0 %v328
  %525 = vmatprep.subr.bf16.mxu0 %v331
  %526 = vmatpush1.bf16.msra.mxu0 %v330
  %527 = vmatprep.subr.bf16.mxu0 %v333
  %528 = vmatpush1.bf16.msra.mxu0 %v332
  %529 = vmatprep.subr.bf16.mxu0 %v335
  %530 = vmatpush1.bf16.msra.mxu0 %v334
  %531 = vmatprep.subr.bf16.mxu0 %v337
  %532 = vmatpush1.bf16.msra.mxu0 %v336
  %533 = vmatprep.subr.bf16.mxu0 %v339
  %534 = vmatpush1.bf16.msra.mxu0 %v338
  %535 = vmatprep.subr.bf16.mxu0 %v341
  %536 = vmatpush1.bf16.msra.mxu0 %v340
  %537 = vmatprep.subr.bf16.mxu0 %v343
  %538 = vmatpush1.bf16.msra.mxu0 %v342
  %539 = vmatprep.subr.bf16.mxu0 %v345
  %540 = vmatpush1.bf16.msra.mxu0 %v344
  %541 = vmatprep.mubr.bf16.mxu0 %v506
  %542 = vmatmul.mubr.bf16.gmra.mrb[0].mxu0 %v505
  %v543 = vpop.f32.mrb[0].mxu0
  %v544 = vadd.f32 0.0, %v543
  %v545 = vpop.f32.mrb[0].mxu0
  %v546 = vadd.f32 0.0, %v545
  %v547 = vpop.f32.mrb[0].mxu0
  %v548 = vpop.f32.mrb[0].mxu0
  %549 = vdwg.mxu0
  %551 = vset.pattern.permute.xlu0 0
  %552 = vperm.xlu0 %551, %v489
  %v553 = vpop.permute.xlu0 %552
  %v555 = vadd.f32 %v553, %v544
  %v556 = vadd.f32 %v553, %v546
  %s557 = sadd.s32 %s347, 256
  %v558 = vstv %s557
  %v559 = vadd.s32 %v416, %v558
  %v560 = vadd.s32 %v417, %v558
  %v561 = vadd.s32 %v559, 1
  %v562 = vadd.s32 %v560, 1
  %v563 = vcvt.s32.f32 %v561
  %v564 = vcvt.s32.f32 %v562
  %v566 = vcombine.high %v492, %v492
  %v568 = vsub.f32 %v555, %v492
  %v569 = vsub.f32 %v556, %v566
  %v570 = vsub.f32 %v433, %v555
  %v571 = vsub.f32 %v433, %v556
  %v572 = vadd.f32 %v433, %v563
  %v573 = vadd.f32 %v433, %v564
  %v574 = vsub.f32 %v572, %v555
  %v575 = vsub.f32 %v573, %v556
  %v576 = vrcp.pop %v574
  %v577 = vmul.f32 %v570, %v576
  %v578 = vrcp.pop %v575
  %v579 = vmul.f32 %v571, %v578
  %v580 = vsub.f32 1.0, %v577
  %v581 = vsub.f32 1.0, %v579
  %vm582 = vcmp.le.f32.partialorder %v563, 1.0
  %vm583 = vcmp.le.f32.partialorder %v564, 1.0
  %v584 = vsub.f32 %v563, 1.0
  %v585 = vsub.f32 %v564, 1.0
  %v586 = vadd.f32 %v433, %v584
  %v587 = vadd.f32 %v433, %v585
  %v588 = vsub.f32 %v586, %v568
  %v589 = vsub.f32 %v587, %v569
  %v590 = vsel %vm582, 1.0, %v588
  %v591 = vsel %vm583, 1.0, %v589
  %v592 = vsub.f32 %v433, %v568
  %v593 = vsub.f32 %v433, %v569
  %v594 = vrcp.pop %v590
  %v595 = vmul.f32 %v592, %v594
  %v596 = vrcp.pop %v591
  %v597 = vmul.f32 %v593, %v596
  %v598 = vsub.f32 1.0, %v595
  %v599 = vsub.f32 1.0, %v597
  %v600 = vsel %vm582, 0.0, %v598
  %v601 = vsel %vm583, 0.0, %v599
  %v602 = vsub.f32 %v580, %v600
  %v603 = vsub.f32 %v581, %v601
  %v606 = vcombine.low %v602, %v603
  %v608 = vmul.f32 %v493, %v606
  %v610 = vcombine.high %v608, %v608
  %v612 = vsel %vm477, %v608, 0.0
  %v613 = vsel %vm477, %v610, 0.0
  %v614 = vadd.f32 %v612, %v613
  %615 = vadd.xlane.f32.xlu0 %v614
  %v616 = vpop.xlane.xlu0 %615
  %v617 = vsub.f32 %v483, %v616
  %v618 = vsel %vm477, %v492, 0.0
  %v619 = vsel %vm477, %v566, 0.0
  %v620 = vadd.f32 %v618, %v619
  %621 = vadd.xlane.f32.xlu0 %v620
  %v622 = vpop.xlane.xlu0 %621
  %v623 = vadd.f32 %v489, %v622
  %v624 = vld [vmem:[%s3] sm:$0xf]
  %v625 = vadd.f32 %v624, %v617
  %vm626 = vcmask 3072
  %627 = vst.msk [vmem:[%s3] sm:$0xf] %vm626, %v625
  %628 = vst.msk [vmem:[#allocation2] sm:$0xf] %vm626, %v623
  // Predicated region
  $region18: #{a_call__.3} parent=0 // pred_check
    _
  $region19: #{a_call__.3} parent=0 // pred_check_branch
    %630 = sbr.rel (0) target = $region21
  $region20: #{a_call__.3} parent=0 // pred_region
    _
  $region21: #{a_call__.3} parent=0 // pred_fallthru
    _
  // Predicated region
  $region22: #{a_call__.3} parent=0 // pred_check
    _
  $region23: #{a_call__.3} parent=0 // pred_check_branch
    %632 = sbr.rel (0) target = $region25
  $region24: #{a_call__.3} parent=0 // pred_region
    _
  $region25: #{a_call__.3} parent=0 // pred_fallthru
    _

</llo_original>
